<compile_context>
chip_gen: v7x
topology: tpu7x:2x2x1
jax: 0.10.0
libtpu: 0.0.40
codegen_flags: <defaults>
</compile_context>

<pallas_src>
import functools

import jax
import jax.numpy as jnp
from jax.experimental import pallas as pl
from jax.experimental.pallas import tpu as pltpu

B, C, L = 2, 64, 16          # batch, time_channels, time_length
K, P = 3, 1                  # first depthwise conv kernel / padding
EPS = 1e-5


def _preconv_kernel(x_ref, p_ref, w_ref, o_ref, *, seg_len):
    # Lane-dense slab: channels on sublanes, (batch*length [+pad]) on lanes.
    x = x_ref[...].astype(jnp.float32)                  # (C, LP): single load, reused for residual
    c, lp = x.shape

    # Position of each lane inside its length-`seg_len` segment (batch folded on lanes).
    pos = jax.lax.broadcasted_iota(jnp.int32, (c, lp), 1) % seg_len

    p = p_ref[...].astype(jnp.float32)                  # packed per-channel params (C, 8)
    w_left, w_mid, w_right = p[:, 0:1], p[:, 1:2], p[:, 2:3]
    shift1, shift2 = p[:, 3:4], p[:, 4:5]

    # Both pre-folded pointwise weights arrive in one stacked (2C, C) array;
    # static sublane-aligned slices of the ref are zero-cost views.
    w1 = w_ref[0:c, :].astype(jnp.float32)              # SepConv1 pointwise * BN1 scale
    w2 = w_ref[c:2 * c, :].astype(jnp.float32)          # SepConv2 (dw*pw) * BN2 scale

    # Depthwise Conv1d (k=3, pad=1, groups=C): XLU rolls + boundary masks,
    # no concatenate / padded temporary, no cross-batch leakage.
    x_l = jnp.where(pos == 0, 0.0, pltpu.roll(x, shift=1, axis=1))                 # x[:, i-1]
    x_r = jnp.where(pos == seg_len - 1, 0.0, pltpu.roll(x, shift=lp - 1, axis=1))  # x[:, i+1]
    acc = w_mid * x + w_left * x_l + w_right * x_r

    # Pointwise Conv1d (1x1) on the MXU; BN1 scale pre-folded into w1; + shift; Swish.
    y = jnp.dot(w1, acc, preferred_element_type=jnp.float32) + shift1
    y = y * jax.nn.sigmoid(y)

    # Second SepConv1d: k=1 depthwise scale and BN2 scale pre-folded into w2; + shift; Swish.
    y = jnp.dot(w2, y, preferred_element_type=jnp.float32) + shift2
    y = y * jax.nn.sigmoid(y)

    # dropout(p=0.0) is identity; residual skip connection; lane-dense store.
    o_ref[...] = (x + y).astype(o_ref.dtype)


def preconv_block(x, w_dw1, w_pw1, scale1, shift1, w_dw2, w_pw2, scale2, shift2):
    Bn, Cn, Ln = x.shape
    BL = Bn * Ln
    LP = max(128, -(-BL // 128) * 128)        # lane-dense slab width (multiple of 128)

    # Fold batch onto the lane axis and zero-pad to a lane-dense slab.
    x_slab = jnp.transpose(x, (1, 0, 2)).reshape(Cn, BL)
    x_slab = jnp.pad(x_slab, ((0, 0), (0, LP - BL)))

    # Fold BN scales (and the k=1 depthwise per-channel scale) into the pointwise
    # weights, then stack both matmul weights into a single array (one DMA).
    w1 = scale1[:, None] * w_pw1                         # (C, C)
    w2 = scale2[:, None] * (w_pw2 * w_dw2[None, :])      # (C, C)
    w_stack = jnp.concatenate([w1, w2], axis=0)          # (2C, C)

    # Pack the remaining small per-channel params into a single (C, 8) array (one DMA).
    params = jnp.concatenate(
        [w_dw1, shift1[:, None], shift2[:, None], jnp.zeros((Cn, 3), x.dtype)],
        axis=1)

    kernel = functools.partial(_preconv_kernel, seg_len=Ln)
    out_slab = pl.pallas_call(
        kernel,
        out_shape=jax.ShapeDtypeStruct((Cn, LP), x.dtype),
        grid=(1,),                                       # whole batch in one step
        in_specs=[
            pl.BlockSpec((Cn, LP), lambda i: (0, 0)),
            pl.BlockSpec((Cn, 8), lambda i: (0, 0)),
            pl.BlockSpec((2 * Cn, Cn), lambda i: (0, 0)),
        ],
        out_specs=pl.BlockSpec((Cn, LP), lambda i: (0, 0)),
        compiler_params=pltpu.CompilerParams(
            dimension_semantics=("arbitrary",)),
    )(x_slab, params, w_stack)

    # Drop lane padding and restore (B, C, L).
    return out_slab[:, :BL].reshape(Cn, Bn, Ln).transpose(1, 0, 2)


def reference_forward(x, w_dw1, w_pw1, scale1, shift1, w_dw2, w_pw2, scale2, shift2):
    dn = ('NCH', 'OIH', 'NCH')
    y = jax.lax.conv_general_dilated(x, w_dw1[:, None, :], (1,), ((P, P),),
                                     dimension_numbers=dn, feature_group_count=C)
    y = jax.lax.conv_general_dilated(y, w_pw1[:, :, None], (1,), ((0, 0),),
                                     dimension_numbers=dn)
    y = y * scale1[None, :, None] + shift1[None, :, None]
    y = y * jax.nn.sigmoid(y)
    y = y * w_dw2[None, :, None]
    y = jax.lax.conv_general_dilated(y, w_pw2[:, :, None], (1,), ((0, 0),),
                                     dimension_numbers=dn)
    y = y * scale2[None, :, None] + shift2[None, :, None]
    y = y * jax.nn.sigmoid(y)
    return x + y


if __name__ == "__main__":
    key = jax.random.PRNGKey(0)
    ks = jax.random.split(key, 14)

    x = jax.random.normal(ks[0], (B, C, L), jnp.float32)

    # Parameter shapes follow the PyTorch module __init__ (bias=False everywhere):
    #   SepConv1: depthwise (C,1,3) -> (C,3) ; pointwise (C,C,1) -> (C,C)
    #   SepConv2: depthwise (C,1,1) -> (C,)  ; pointwise (C,C,1) -> (C,C)
    w_dw1 = 0.2 * jax.random.normal(ks[1], (C, K), jnp.float32)
    w_pw1 = 0.1 * jax.random.normal(ks[2], (C, C), jnp.float32)
    w_dw2 = 0.2 * jax.random.normal(ks[3], (C,), jnp.float32)
    w_pw2 = 0.1 * jax.random.normal(ks[4], (C, C), jnp.float32)

    gamma1 = 1.0 + 0.1 * jax.random.normal(ks[5], (C,), jnp.float32)
    beta1 = 0.1 * jax.random.normal(ks[6], (C,), jnp.float32)
    mean1 = 0.1 * jax.random.normal(ks[7], (C,), jnp.float32)
    var1 = 0.5 + jnp.abs(jax.random.normal(ks[8], (C,), jnp.float32))

    gamma2 = 1.0 + 0.1 * jax.random.normal(ks[9], (C,), jnp.float32)
    beta2 = 0.1 * jax.random.normal(ks[10], (C,), jnp.float32)
    mean2 = 0.1 * jax.random.normal(ks[11], (C,), jnp.float32)
    var2 = 0.5 + jnp.abs(jax.random.normal(ks[12], (C,), jnp.float32))

    # Fold BatchNorm (inference) into per-channel scale/shift.
    scale1 = gamma1 / jnp.sqrt(var1 + EPS)
    shift1 = beta1 - mean1 * scale1
    scale2 = gamma2 / jnp.sqrt(var2 + EPS)
    shift2 = beta2 - mean2 * scale2

    run = jax.jit(preconv_block)
    out = run(x, w_dw1, w_pw1, scale1, shift1, w_dw2, w_pw2, scale2, shift2)
    out = jax.block_until_ready(out)

    ref = reference_forward(x, w_dw1, w_pw1, scale1, shift1,
                            w_dw2, w_pw2, scale2, shift2)
    assert out.shape == (B, C, L)
    assert jnp.allclose(out, ref, atol=1e-4, rtol=1e-4), "mismatch vs pure-JAX reference"

    print("KERNEL_OK")
</pallas_src>

<mosaic_0001>
module attributes {stable_mosaic.version = 11 : i64} {
  func.func @_preconv_kernel(%arg0: i32, %arg1: memref<64x128xf32, #tpu.memory_space<vmem>>, %arg2: memref<64x8xf32, #tpu.memory_space<vmem>>, %arg3: memref<128x64xf32, #tpu.memory_space<vmem>>, %arg4: memref<64x128xf32, #tpu.memory_space<vmem>>) attributes {dimension_semantics = [#tpu.dimension_semantics<arbitrary>], iteration_bounds = array<i64: 1>, scalar_prefetch = 0 : i64, scratch_operands = 0 : i64, tpu.core_type = #tpu.core_type<tc>, window_params = [{pipeline_mode = #tpu.pipeline_mode<synchronous>, transform_indices = @transform_0, window_bounds = array<i64: 64, 128>}, {pipeline_mode = #tpu.pipeline_mode<synchronous>, transform_indices = @transform_1, window_bounds = array<i64: 64, 8>}, {pipeline_mode = #tpu.pipeline_mode<synchronous>, transform_indices = @transform_2, window_bounds = array<i64: 128, 64>}, {pipeline_mode = #tpu.pipeline_mode<synchronous>, transform_indices = @transform_3, window_bounds = array<i64: 64, 128>}]} {
    %c0 = arith.constant 0 : index
    %c0_0 = arith.constant 0 : index
    %0 = vector.load %arg1[%c0, %c0_0] : memref<64x128xf32, #tpu.memory_space<vmem>>, vector<64x128xf32>
    %1 = tpu.iota {dimensions = array<i32: 1>} : vector<64x128xi32>
    %c16_i32 = arith.constant 16 : i32
    %c0_i32 = arith.constant 0 : i32
    %2 = arith.cmpi eq, %c16_i32, %c0_i32 : i32
    %c1_i32 = arith.constant 1 : i32
    %3 = arith.select %2, %c1_i32, %c16_i32 : i32
    %4 = vector.broadcast %3 : i32 to vector<64x128xi32>
    %5 = arith.remsi %1, %4 : vector<64x128xi32>
    %c0_i32_1 = arith.constant 0 : i32
    %6 = vector.broadcast %c0_i32_1 : i32 to vector<64x128xi32>
    %7 = arith.cmpi ne, %5, %6 : vector<64x128xi32>
    %c0_i32_2 = arith.constant 0 : i32
    %8 = vector.broadcast %c0_i32_2 : i32 to vector<64x128xi32>
    %9 = arith.cmpi slt, %5, %8 : vector<64x128xi32>
    %c0_i32_3 = arith.constant 0 : i32
    %10 = arith.cmpi slt, %3, %c0_i32_3 : i32
    %11 = vector.broadcast %10 : i1 to vector<64x128xi1>
    %12 = vector.broadcast %11 : vector<64x128xi1> to vector<64x128xi1>
    %13 = arith.xori %9, %12 : vector<64x128xi1>
    %14 = arith.andi %13, %7 : vector<64x128xi1>
    %15 = vector.broadcast %3 : i32 to vector<64x128xi32>
    %16 = arith.addi %5, %15 : vector<64x128xi32>
    %17 = arith.select %14, %16, %5 : vector<64x128xi1>, vector<64x128xi32>
    %c0_4 = arith.constant 0 : index
    %c0_5 = arith.constant 0 : index
    %18 = vector.load %arg2[%c0_4, %c0_5] : memref<64x8xf32, #tpu.memory_space<vmem>>, vector<64x8xf32>
    %19 = vector.extract_strided_slice %18 {offsets = [0, 0], sizes = [64, 1], strides = [1, 1]} : vector<64x8xf32> to vector<64x1xf32>
    %20 = vector.extract_strided_slice %18 {offsets = [0, 1], sizes = [64, 1], strides = [1, 1]} : vector<64x8xf32> to vector<64x1xf32>
    %21 = vector.extract_strided_slice %18 {offsets = [0, 2], sizes = [64, 1], strides = [1, 1]} : vector<64x8xf32> to vector<64x1xf32>
    %22 = vector.extract_strided_slice %18 {offsets = [0, 3], sizes = [64, 1], strides = [1, 1]} : vector<64x8xf32> to vector<64x1xf32>
    %23 = vector.extract_strided_slice %18 {offsets = [0, 4], sizes = [64, 1], strides = [1, 1]} : vector<64x8xf32> to vector<64x1xf32>
    %c0_6 = arith.constant 0 : index
    %c0_7 = arith.constant 0 : index
    %24 = vector.load %arg3[%c0_6, %c0_7] : memref<128x64xf32, #tpu.memory_space<vmem>>, vector<64x64xf32>
    %c64 = arith.constant 64 : index
    %c0_8 = arith.constant 0 : index
    %25 = vector.load %arg3[%c64, %c0_8] : memref<128x64xf32, #tpu.memory_space<vmem>>, vector<64x64xf32>
    %c0_i32_9 = arith.constant 0 : i32
    %26 = vector.broadcast %c0_i32_9 : i32 to vector<64x128xi32>
    %27 = arith.cmpi eq, %17, %26 : vector<64x128xi32>
    %c1_i32_10 = arith.constant 1 : i32
    %28 = tpu.dynamic_rotate %0 by %c1_i32_10 dim 1 : vector<64x128xf32>, i32 -> vector<64x128xf32>
    %cst = arith.constant 0.000000e+00 : f32
    %29 = vector.broadcast %cst : f32 to vector<64x128xf32>
    %30 = arith.select %27, %29, %28 : vector<64x128xi1>, vector<64x128xf32>
    %c15_i32 = arith.constant 15 : i32
    %31 = vector.broadcast %c15_i32 : i32 to vector<64x128xi32>
    %32 = arith.cmpi eq, %17, %31 : vector<64x128xi32>
    %c127_i32 = arith.constant 127 : i32
    %33 = tpu.dynamic_rotate %0 by %c127_i32 dim 1 : vector<64x128xf32>, i32 -> vector<64x128xf32>
    %cst_11 = arith.constant 0.000000e+00 : f32
    %34 = vector.broadcast %cst_11 : f32 to vector<64x128xf32>
    %35 = arith.select %32, %34, %33 : vector<64x128xi1>, vector<64x128xf32>
    %36 = vector.broadcast %20 : vector<64x1xf32> to vector<64x128xf32>
    %37 = arith.mulf %36, %0 : vector<64x128xf32>
    %38 = vector.broadcast %19 : vector<64x1xf32> to vector<64x128xf32>
    %39 = arith.mulf %38, %30 : vector<64x128xf32>
    %40 = arith.addf %37, %39 : vector<64x128xf32>
    %41 = vector.broadcast %21 : vector<64x1xf32> to vector<64x128xf32>
    %42 = arith.mulf %41, %35 : vector<64x128xf32>
    %43 = arith.addf %40, %42 : vector<64x128xf32>
    %cst_12 = arith.constant dense<0.000000e+00> : vector<64x128xf32>
    %44 = tpu.matmul %24, %43, %cst_12 {dimension_numbers = #tpu.dot_dimension_numbers<[1], [0], [0], [1], [0, 0, 1, 1], [], []>} : vector<64x64xf32>, vector<64x128xf32>, vector<64x128xf32> -> vector<64x128xf32>
    %45 = vector.broadcast %22 : vector<64x1xf32> to vector<64x128xf32>
    %46 = arith.addf %44, %45 : vector<64x128xf32>
    %47 = arith.negf %46 : vector<64x128xf32>
    %48 = math.exp %47 : vector<64x128xf32>
    %cst_13 = arith.constant 1.000000e+00 : f32
    %49 = vector.broadcast %cst_13 : f32 to vector<64x128xf32>
    %50 = arith.addf %49, %48 : vector<64x128xf32>
    %51 = arith.divf %49, %50 : vector<64x128xf32>
    %52 = arith.mulf %46, %51 : vector<64x128xf32>
    %cst_14 = arith.constant dense<0.000000e+00> : vector<64x128xf32>
    %53 = tpu.matmul %25, %52, %cst_14 {dimension_numbers = #tpu.dot_dimension_numbers<[1], [0], [0], [1], [0, 0, 1, 1], [], []>} : vector<64x64xf32>, vector<64x128xf32>, vector<64x128xf32> -> vector<64x128xf32>
    %54 = vector.broadcast %23 : vector<64x1xf32> to vector<64x128xf32>
    %55 = arith.addf %53, %54 : vector<64x128xf32>
    %56 = arith.negf %55 : vector<64x128xf32>
    %57 = math.exp %56 : vector<64x128xf32>
    %cst_15 = arith.constant 1.000000e+00 : f32
    %58 = vector.broadcast %cst_15 : f32 to vector<64x128xf32>
    %59 = arith.addf %58, %57 : vector<64x128xf32>
    %60 = arith.divf %58, %59 : vector<64x128xf32>
    %61 = arith.mulf %55, %60 : vector<64x128xf32>
    %62 = arith.addf %0, %61 : vector<64x128xf32>
    %c0_16 = arith.constant 0 : index
    %c0_17 = arith.constant 0 : index
    %63 = vector.load %arg4[%c0_16, %c0_17] : memref<64x128xf32, #tpu.memory_space<vmem>>, vector<64x128xf32>
    tpu.vector_store %arg4[%c0_16, %c0_17], %62 {strides = array<i32>} : memref<64x128xf32, #tpu.memory_space<vmem>>, vector<64x128xf32>,
    return
  }
  func.func @transform_0(%arg0: i32) -> (i32, i32) {
    %c0_i32 = arith.constant 0 : i32
    %c0_i32_0 = arith.constant 0 : i32
    %c0_i32_1 = arith.constant 0 : i32
    return %c0_i32, %c0_i32_0 : i32, i32
  }
  func.func @transform_1(%arg0: i32) -> (i32, i32) {
    %c0_i32 = arith.constant 0 : i32
    %c0_i32_0 = arith.constant 0 : i32
    %c0_i32_1 = arith.constant 0 : i32
    return %c0_i32, %c0_i32_0 : i32, i32
  }
  func.func @transform_2(%arg0: i32) -> (i32, i32) {
    %c0_i32 = arith.constant 0 : i32
    %c0_i32_0 = arith.constant 0 : i32
    %c0_i32_1 = arith.constant 0 : i32
    return %c0_i32, %c0_i32_0 : i32, i32
  }
  func.func @transform_3(%arg0: i32) -> (i32, i32) {
    %c0_i32 = arith.constant 0 : i32
    %c0_i32_0 = arith.constant 0 : i32
    %c0_i32_1 = arith.constant 0 : i32
    return %c0_i32, %c0_i32_0 : i32, i32
  }
}

</mosaic_0001>

<llo_original>
// kernel: preconv_block.1
$region0: #{preconv_block.1}
  #allocation0 [shape = 'u32[]', space=smem, size = 0x4, offset = 0x4, fixed_abs, tag = 'smem constant byte address 0x4 - core index']
  #allocation1 [shape = 'u32[144,128]{1,0:T(1,128)}', space=vmem, size = 0x12000, scoped, tag = 'internal scratch']
  %s0 = inlined_call_operand.vmem [shape: f32[64,128], index: 0, kind: input, shape index: {}]
  %s1 = inlined_call_operand.vmem [shape: f32[64,8], index: 1, kind: input, shape index: {}]
  %s2 = inlined_call_operand.vmem [shape: f32[128,64], index: 2, kind: input, shape index: {}]
  %s3 = inlined_call_operand.vmem [shape: f32[64,128], index: 3, kind: output, shape index: {}]
  %s4 = sld [smem:[#allocation0]]
  $region22: #{preconv_block.1} parent=0
    _
  %s6 = ssub.s32 1, %s4
  %s7 = scalar_select 0, %s6, %s4
  // Predicated region
  $region2: #{preconv_block.1} parent=0 // pred_check
    _
  $region3: #{preconv_block.1} parent=0 // pred_check_branch
    %9 = sbr.rel (0) target = $region5
  $region4: #{preconv_block.1} parent=0 // pred_region
    _
  $region5: #{preconv_block.1} parent=0 // pred_fallthru
    _
  // Predicated region
  $region6: #{preconv_block.1} parent=0 // pred_check
    _
  $region7: #{preconv_block.1} parent=0 // pred_check_branch
    %11 = sbr.rel (0) target = $region9
  $region8: #{preconv_block.1} parent=0 // pred_region
    _
  $region9: #{preconv_block.1} parent=0 // pred_fallthru
    _
  // Predicated region
  $region10: #{preconv_block.1} parent=0 // pred_check
    _
  $region11: #{preconv_block.1} parent=0 // pred_check_branch
    %13 = sbr.rel (0) target = $region13
  $region12: #{preconv_block.1} parent=0 // pred_region
    _
  $region13: #{preconv_block.1} parent=0 // pred_fallthru
    _
  %v14 = vld [vmem:[%s0] sm:$0xff]
  %v15 = vld [vmem:[%s0 + $0x8] sm:$0xff]
  %v16 = vld [vmem:[%s0 + $0x10] sm:$0xff]
  %v17 = vld [vmem:[%s0 + $0x18] sm:$0xff]
  %v18 = vld [vmem:[%s0 + $0x20] sm:$0xff]
  %v19 = vld [vmem:[%s0 + $0x28] sm:$0xff]
  %v20 = vld [vmem:[%s0 + $0x30] sm:$0xff]
  %v21 = vld [vmem:[%s0 + $0x38] sm:$0xff]
  %v22 = vlaneseq
  %v23 = vand.u32 %v22, 127
  %vm24 = vcmp.lt.s32.totalorder %v23, 0
  %v25 = vsub.s32 0, %v23
  %v26 = vsel %vm24, %v25, %v23
  %v27 = vshrl.u32 %v26, 4
  %v28 = vand.u32 %v26, 15
  %v29 = vsub.s32 0, %v28
  %v30 = vsel %vm24, %v29, %v28
  %vm31 = vcmp.ne.s32.totalorder %v30, 0
  %vm32 = vcmp.lt.s32.totalorder %v30, 0
  %vm33 = vmand %vm32, %vm31
  %v34 = vadd.s32 %v30, 16
  %v35 = vsel %vm33, %v34, %v30
  %v36 = vld [vmem:[%s1] sm:$0xff]
  %v37 = vld [vmem:[%s1 + $0x8] sm:$0xff]
  %v38 = vld [vmem:[%s1 + $0x10] sm:$0xff]
  %v39 = vld [vmem:[%s1 + $0x18] sm:$0xff]
  %v40 = vld [vmem:[%s1 + $0x20] sm:$0xff]
  %v41 = vld [vmem:[%s1 + $0x28] sm:$0xff]
  %v42 = vld [vmem:[%s1 + $0x30] sm:$0xff]
  %v43 = vld [vmem:[%s1 + $0x38] sm:$0xff]
  %v44 = vld [vmem:[%s2] sm:$0xff]
  %v45 = vld [vmem:[%s2 + $0x8] sm:$0xff]
  %v46 = vld [vmem:[%s2 + $0x10] sm:$0xff]
  %v47 = vld [vmem:[%s2 + $0x18] sm:$0xff]
  %v48 = vld [vmem:[%s2 + $0x20] sm:$0xff]
  %v49 = vld [vmem:[%s2 + $0x28] sm:$0xff]
  %v50 = vld [vmem:[%s2 + $0x30] sm:$0xff]
  %v51 = vld [vmem:[%s2 + $0x38] sm:$0xff]
  %v52 = vld [vmem:[%s2 + $0x40] sm:$0xff]
  %v53 = vld [vmem:[%s2 + $0x48] sm:$0xff]
  %v54 = vld [vmem:[%s2 + $0x50] sm:$0xff]
  %v55 = vld [vmem:[%s2 + $0x58] sm:$0xff]
  %v56 = vld [vmem:[%s2 + $0x60] sm:$0xff]
  %v57 = vld [vmem:[%s2 + $0x68] sm:$0xff]
  %v58 = vld [vmem:[%s2 + $0x70] sm:$0xff]
  %v59 = vld [vmem:[%s2 + $0x78] sm:$0xff]
  %vm60 = vcmp.eq.s32.totalorder %v35, 0
  %61 = vrot.lane.b32.xlu0 %v14, 1
  %v62 = vpop.permute.xlu0 %61
  %63 = vrot.lane.b32.xlu0 %v15, 1
  %v64 = vpop.permute.xlu0 %63
  %65 = vrot.lane.b32.xlu0 %v16, 1
  %v66 = vpop.permute.xlu0 %65
  %67 = vrot.lane.b32.xlu0 %v17, 1
  %v68 = vpop.permute.xlu0 %67
  %69 = vrot.lane.b32.xlu0 %v18, 1
  %v70 = vpop.permute.xlu0 %69
  %71 = vrot.lane.b32.xlu0 %v19, 1
  %v72 = vpop.permute.xlu0 %71
  %73 = vrot.lane.b32.xlu0 %v20, 1
  %v74 = vpop.permute.xlu0 %73
  %75 = vrot.lane.b32.xlu0 %v21, 1
  %v76 = vpop.permute.xlu0 %75
  %v77 = vsel %vm60, 0.0, %v62
  %v78 = vsel %vm60, 0.0, %v64
  %v79 = vsel %vm60, 0.0, %v66
  %v80 = vsel %vm60, 0.0, %v68
  %v81 = vsel %vm60, 0.0, %v70
  %v82 = vsel %vm60, 0.0, %v72
  %v83 = vsel %vm60, 0.0, %v74
  %v84 = vsel %vm60, 0.0, %v76
  %vm85 = vcmp.eq.s32.totalorder %v35, 15
  %86 = vrot.lane.b32.xlu0 %v14, 127
  %v87 = vpop.permute.xlu0 %86
  %88 = vrot.lane.b32.xlu0 %v15, 127
  %v89 = vpop.permute.xlu0 %88
  %90 = vrot.lane.b32.xlu0 %v16, 127
  %v91 = vpop.permute.xlu0 %90
  %92 = vrot.lane.b32.xlu0 %v17, 127
  %v93 = vpop.permute.xlu0 %92
  %94 = vrot.lane.b32.xlu0 %v18, 127
  %v95 = vpop.permute.xlu0 %94
  %96 = vrot.lane.b32.xlu0 %v19, 127
  %v97 = vpop.permute.xlu0 %96
  %98 = vrot.lane.b32.xlu0 %v20, 127
  %v99 = vpop.permute.xlu0 %98
  %100 = vrot.lane.b32.xlu0 %v21, 127
  %v101 = vpop.permute.xlu0 %100
  %v102 = vsel %vm85, 0.0, %v87
  %v103 = vsel %vm85, 0.0, %v89
  %v104 = vsel %vm85, 0.0, %v91
  %v105 = vsel %vm85, 0.0, %v93
  %v106 = vsel %vm85, 0.0, %v95
  %v107 = vsel %vm85, 0.0, %v97
  %v108 = vsel %vm85, 0.0, %v99
  %v109 = vsel %vm85, 0.0, %v101
  %111 = vset.pattern.permute.xlu0 1
  %112 = vperm.xlu0 %111, %v36
  %v113 = vpop.permute.xlu0 %112
  %116 = vset.pattern.permute.xlu0 1
  %117 = vperm.xlu0 %116, %v37
  %v118 = vpop.permute.xlu0 %117
  %121 = vset.pattern.permute.xlu0 1
  %122 = vperm.xlu0 %121, %v38
  %v123 = vpop.permute.xlu0 %122
  %126 = vset.pattern.permute.xlu0 1
  %127 = vperm.xlu0 %126, %v39
  %v128 = vpop.permute.xlu0 %127
  %131 = vset.pattern.permute.xlu0 1
  %132 = vperm.xlu0 %131, %v40
  %v133 = vpop.permute.xlu0 %132
  %136 = vset.pattern.permute.xlu0 1
  %137 = vperm.xlu0 %136, %v41
  %v138 = vpop.permute.xlu0 %137
  %141 = vset.pattern.permute.xlu0 1
  %142 = vperm.xlu0 %141, %v42
  %v143 = vpop.permute.xlu0 %142
  %146 = vset.pattern.permute.xlu0 1
  %147 = vperm.xlu0 %146, %v43
  %v148 = vpop.permute.xlu0 %147
  %v150 = vmul.f32 %v113, %v14
  %v151 = vmul.f32 %v118, %v15
  %v152 = vmul.f32 %v123, %v16
  %v153 = vmul.f32 %v128, %v17
  %v154 = vmul.f32 %v133, %v18
  %v155 = vmul.f32 %v138, %v19
  %v156 = vmul.f32 %v143, %v20
  %v157 = vmul.f32 %v148, %v21
  %158 = vset.pattern.permute.xlu0 0
  %159 = vperm.xlu0 %158, %v36
  %v160 = vpop.permute.xlu0 %159
  %162 = vset.pattern.permute.xlu0 0
  %163 = vperm.xlu0 %162, %v37
  %v164 = vpop.permute.xlu0 %163
  %166 = vset.pattern.permute.xlu0 0
  %167 = vperm.xlu0 %166, %v38
  %v168 = vpop.permute.xlu0 %167
  %170 = vset.pattern.permute.xlu0 0
  %171 = vperm.xlu0 %170, %v39
  %v172 = vpop.permute.xlu0 %171
  %174 = vset.pattern.permute.xlu0 0
  %175 = vperm.xlu0 %174, %v40
  %v176 = vpop.permute.xlu0 %175
  %178 = vset.pattern.permute.xlu0 0
  %179 = vperm.xlu0 %178, %v41
  %v180 = vpop.permute.xlu0 %179
  %182 = vset.pattern.permute.xlu0 0
  %183 = vperm.xlu0 %182, %v42
  %v184 = vpop.permute.xlu0 %183
  %186 = vset.pattern.permute.xlu0 0
  %187 = vperm.xlu0 %186, %v43
  %v188 = vpop.permute.xlu0 %187
  %v190 = vmul.f32 %v160, %v77
  %v191 = vmul.f32 %v164, %v78
  %v192 = vmul.f32 %v168, %v79
  %v193 = vmul.f32 %v172, %v80
  %v194 = vmul.f32 %v176, %v81
  %v195 = vmul.f32 %v180, %v82
  %v196 = vmul.f32 %v184, %v83
  %v197 = vmul.f32 %v188, %v84
  %v198 = vadd.f32 %v150, %v190
  %v199 = vadd.f32 %v151, %v191
  %v200 = vadd.f32 %v152, %v192
  %v201 = vadd.f32 %v153, %v193
  %v202 = vadd.f32 %v154, %v194
  %v203 = vadd.f32 %v155, %v195
  %v204 = vadd.f32 %v156, %v196
  %v205 = vadd.f32 %v157, %v197
  %206 = vset.pattern.permute.xlu0 2
  %207 = vperm.xlu0 %206, %v36
  %v208 = vpop.permute.xlu0 %207
  %210 = vset.pattern.permute.xlu0 2
  %211 = vperm.xlu0 %210, %v37
  %v212 = vpop.permute.xlu0 %211
  %214 = vset.pattern.permute.xlu0 2
  %215 = vperm.xlu0 %214, %v38
  %v216 = vpop.permute.xlu0 %215
  %218 = vset.pattern.permute.xlu0 2
  %219 = vperm.xlu0 %218, %v39
  %v220 = vpop.permute.xlu0 %219
  %222 = vset.pattern.permute.xlu0 2
  %223 = vperm.xlu0 %222, %v40
  %v224 = vpop.permute.xlu0 %223
  %226 = vset.pattern.permute.xlu0 2
  %227 = vperm.xlu0 %226, %v41
  %v228 = vpop.permute.xlu0 %227
  %230 = vset.pattern.permute.xlu0 2
  %231 = vperm.xlu0 %230, %v42
  %v232 = vpop.permute.xlu0 %231
  %234 = vset.pattern.permute.xlu0 2
  %235 = vperm.xlu0 %234, %v43
  %v236 = vpop.permute.xlu0 %235
  %v238 = vmul.f32 %v208, %v102
  %v239 = vmul.f32 %v212, %v103
  %v240 = vmul.f32 %v216, %v104
  %v241 = vmul.f32 %v220, %v105
  %v242 = vmul.f32 %v224, %v106
  %v243 = vmul.f32 %v228, %v107
  %v244 = vmul.f32 %v232, %v108
  %v245 = vmul.f32 %v236, %v109
  %v246 = vadd.f32 %v198, %v238
  %v247 = vadd.f32 %v199, %v239
  %v248 = vadd.f32 %v200, %v240
  %v249 = vadd.f32 %v201, %v241
  %v250 = vadd.f32 %v202, %v242
  %v251 = vadd.f32 %v203, %v243
  %v252 = vadd.f32 %v204, %v244
  %v253 = vadd.f32 %v205, %v245
  %254 = vset.pattern.permute.xlu0 3
  %255 = vperm.xlu0 %254, %v36
  %v256 = vpop.permute.xlu0 %255
  %258 = vset.pattern.permute.xlu0 3
  %259 = vperm.xlu0 %258, %v37
  %v260 = vpop.permute.xlu0 %259
  %262 = vset.pattern.permute.xlu0 3
  %263 = vperm.xlu0 %262, %v38
  %v264 = vpop.permute.xlu0 %263
  %266 = vset.pattern.permute.xlu0 3
  %267 = vperm.xlu0 %266, %v39
  %v268 = vpop.permute.xlu0 %267
  %270 = vset.pattern.permute.xlu0 3
  %271 = vperm.xlu0 %270, %v40
  %v272 = vpop.permute.xlu0 %271
  %274 = vset.pattern.permute.xlu0 3
  %275 = vperm.xlu0 %274, %v41
  %v276 = vpop.permute.xlu0 %275
  %278 = vset.pattern.permute.xlu0 3
  %279 = vperm.xlu0 %278, %v42
  %v280 = vpop.permute.xlu0 %279
  %282 = vset.pattern.permute.xlu0 3
  %283 = vperm.xlu0 %282, %v43
  %v284 = vpop.permute.xlu0 %283
  %vm286 = vcmask 523264
  %v288 = vsel %vm286, %v44, 0
  %v291 = vsel %vm286, %v45, 0
  %v294 = vsel %vm286, %v46, 0
  %v297 = vsel %vm286, %v47, 0
  %v300 = vsel %vm286, %v48, 0
  %v303 = vsel %vm286, %v49, 0
  %v306 = vsel %vm286, %v50, 0
  %v309 = vsel %vm286, %v51, 0
  %311 = vmatprep.subr.mxu0 0.0
  %312 = vmatpush1.msra.mxu0 %v246
  %313 = vmatprep.subr.mxu0 0.0
  %314 = vmatpush1.msra.mxu0 %v247
  %315 = vmatprep.subr.mxu0 0.0
  %316 = vmatpush1.msra.mxu0 %v248
  %317 = vmatprep.subr.mxu0 0.0
  %318 = vmatpush1.msra.mxu0 %v249
  %319 = vmatprep.subr.mxu0 0.0
  %320 = vmatpush1.msra.mxu0 %v250
  %321 = vmatprep.subr.mxu0 0.0
  %322 = vmatpush1.msra.mxu0 %v251
  %323 = vmatprep.subr.mxu0 0.0
  %324 = vmatpush1.msra.mxu0 %v252
  %325 = vmatprep.subr.mxu0 0.0
  %326 = vmatpush1.msra.mxu0 %v253
  %327 = vmatprep.subr.mxu0 0.0
  %328 = vmatpush1.msra.mxu0 0.0
  %329 = vmatprep.subr.mxu0 0.0
  %330 = vmatpush1.msra.mxu0 0.0
  %331 = vmatprep.subr.mxu0 0.0
  %332 = vmatpush1.msra.mxu0 0.0
  %333 = vmatprep.subr.mxu0 0.0
  %334 = vmatpush1.msra.mxu0 0.0
  %335 = vmatprep.subr.mxu0 0.0
  %336 = vmatpush1.msra.mxu0 0.0
  %337 = vmatprep.subr.mxu0 0.0
  %338 = vmatpush1.msra.mxu0 0.0
  %339 = vmatprep.subr.mxu0 0.0
  %340 = vmatpush1.msra.mxu0 0.0
  %341 = vmatprep.subr.mxu0 0.0
  %342 = vmatpush1.msra.mxu0 0.0
  %343 = vmatprep.subr.mxu0 0.0
  %344 = vmatpush1.msra.mxu0 0.0
  %345 = vmatprep.subr.mxu0 0.0
  %346 = vmatpush1.msra.mxu0 0.0
  %347 = vmatprep.subr.mxu0 0.0
  %348 = vmatpush1.msra.mxu0 0.0
  %349 = vmatprep.subr.mxu0 0.0
  %350 = vmatpush1.msra.mxu0 0.0
  %351 = vmatprep.subr.mxu0 0.0
  %352 = vmatpush1.msra.mxu0 0.0
  %353 = vmatprep.subr.mxu0 0.0
  %354 = vmatpush1.msra.mxu0 0.0
  %355 = vmatprep.subr.mxu0 0.0
  %356 = vmatpush1.msra.mxu0 0.0
  %357 = vmatprep.subr.mxu0 0.0
  %358 = vmatpush1.msra.mxu0 0.0
  %359 = vmatprep.subr.mxu0 0.0
  %360 = vmatpush1.msra.mxu0 0.0
  %361 = vmatprep.subr.mxu0 0.0
  %362 = vmatpush1.msra.mxu0 0.0
  %363 = vmatprep.subr.mxu0 0.0
  %364 = vmatpush1.msra.mxu0 0.0
  %365 = vmatprep.subr.mxu0 0.0
  %366 = vmatpush1.msra.mxu0 0.0
  %367 = vmatprep.subr.mxu0 0.0
  %368 = vmatpush1.msra.mxu0 0.0
  %369 = vmatprep.subr.mxu0 0.0
  %370 = vmatpush1.msra.mxu0 0.0
  %371 = vmatprep.subr.mxu0 0.0
  %372 = vmatpush1.msra.mxu0 0.0
  %373 = vmatprep.subr.mxu0 0.0
  %374 = vmatpush1.msra.mxu0 0.0
  %375 = vmatprep.mubr.f32.mxu0 0.0
  %376 = vmatmul.mubr.f32.gmra.mrb[0].mxu0 %v288
  %v377 = vpop.f32.mrb[0].mxu0
  %v378 = vadd.f32 %v256, %v377
  %v379 = vpop.f32.mrb[0].mxu0
  %380 = vmatprep.mubr.f32.mxu0 0.0
  %381 = vmatmul.mubr.f32.gmra.mrb[0].mxu0 %v291
  %v382 = vpop.f32.mrb[0].mxu0
  %v383 = vadd.f32 %v260, %v382
  %v384 = vpop.f32.mrb[0].mxu0
  %385 = vmatprep.mubr.f32.mxu0 0.0
  %386 = vmatmul.mubr.f32.gmra.mrb[0].mxu0 %v294
  %v387 = vpop.f32.mrb[0].mxu0
  %v388 = vadd.f32 %v264, %v387
  %v389 = vpop.f32.mrb[0].mxu0
  %390 = vmatprep.mubr.f32.mxu0 0.0
  %391 = vmatmul.mubr.f32.gmra.mrb[0].mxu0 %v297
  %v392 = vpop.f32.mrb[0].mxu0
  %v393 = vadd.f32 %v268, %v392
  %v394 = vpop.f32.mrb[0].mxu0
  %395 = vmatprep.mubr.f32.mxu0 0.0
  %396 = vmatmul.mubr.f32.gmra.mrb[0].mxu0 %v300
  %v397 = vpop.f32.mrb[0].mxu0
  %v398 = vadd.f32 %v272, %v397
  %v399 = vpop.f32.mrb[0].mxu0
  %400 = vmatprep.mubr.f32.mxu0 0.0
  %401 = vmatmul.mubr.f32.gmra.mrb[0].mxu0 %v303
  %v402 = vpop.f32.mrb[0].mxu0
  %v403 = vadd.f32 %v276, %v402
  %v404 = vpop.f32.mrb[0].mxu0
  %405 = vmatprep.mubr.f32.mxu0 0.0
  %406 = vmatmul.mubr.f32.gmra.mrb[0].mxu0 %v306
  %v407 = vpop.f32.mrb[0].mxu0
  %v408 = vadd.f32 %v280, %v407
  %v409 = vpop.f32.mrb[0].mxu0
  %410 = vmatprep.mubr.f32.mxu0 0.0
  %411 = vmatmul.mubr.f32.gmra.mrb[0].mxu0 %v309
  %v412 = vpop.f32.mrb[0].mxu0
  %v413 = vadd.f32 %v284, %v412
  %v414 = vpop.f32.mrb[0].mxu0
  %415 = vdwg.mxu0
  %v416 = vxor.u32 %v378, 2147483648
  %v417 = vxor.u32 %v383, 2147483648
  %v418 = vxor.u32 %v388, 2147483648
  %v419 = vxor.u32 %v393, 2147483648
  %v420 = vxor.u32 %v398, 2147483648
  %v421 = vxor.u32 %v403, 2147483648
  %v422 = vxor.u32 %v408, 2147483648
  %v423 = vxor.u32 %v413, 2147483648
  %v424 = vmul.f32 %v416, 1.442695
  %v425 = vpow.pop %v424
  %v426 = vmul.f32 %v417, 1.442695
  %v427 = vpow.pop %v426
  %v428 = vmul.f32 %v418, 1.442695
  %v429 = vpow.pop %v428
  %v430 = vmul.f32 %v419, 1.442695
  %v431 = vpow.pop %v430
  %v432 = vmul.f32 %v420, 1.442695
  %v433 = vpow.pop %v432
  %v434 = vmul.f32 %v421, 1.442695
  %v435 = vpow.pop %v434
  %v436 = vmul.f32 %v422, 1.442695
  %v437 = vpow.pop %v436
  %v438 = vmul.f32 %v423, 1.442695
  %v439 = vpow.pop %v438
  %v440 = vadd.f32 %v425, 1.0
  %v441 = vadd.f32 %v427, 1.0
  %v442 = vadd.f32 %v429, 1.0
  %v443 = vadd.f32 %v431, 1.0
  %v444 = vadd.f32 %v433, 1.0
  %v445 = vadd.f32 %v435, 1.0
  %v446 = vadd.f32 %v437, 1.0
  %v447 = vadd.f32 %v439, 1.0
  %v448 = vrcp.pop %v440
  %v449 = vmul.f32 1.0, %v448
  %v450 = vrcp.pop %v441
  %v451 = vmul.f32 1.0, %v450
  %v452 = vrcp.pop %v442
  %v453 = vmul.f32 1.0, %v452
  %v454 = vrcp.pop %v443
  %v455 = vmul.f32 1.0, %v454
  %v456 = vrcp.pop %v444
  %v457 = vmul.f32 1.0, %v456
  %v458 = vrcp.pop %v445
  %v459 = vmul.f32 1.0, %v458
  %v460 = vrcp.pop %v446
  %v461 = vmul.f32 1.0, %v460
  %v462 = vrcp.pop %v447
  %v463 = vmul.f32 1.0, %v462
  %v464 = vmul.f32 %v378, %v449
  %v465 = vmul.f32 %v383, %v451
  %v466 = vmul.f32 %v388, %v453
  %v467 = vmul.f32 %v393, %v455
  %v468 = vmul.f32 %v398, %v457
  %v469 = vmul.f32 %v403, %v459
  %v470 = vmul.f32 %v408, %v461
  %v471 = vmul.f32 %v413, %v463
  %472 = vset.pattern.permute.xlu0 4
  %473 = vperm.xlu0 %472, %v36
  %v474 = vpop.permute.xlu0 %473
  %476 = vset.pattern.permute.xlu0 4
  %477 = vperm.xlu0 %476, %v37
  %v478 = vpop.permute.xlu0 %477
  %480 = vset.pattern.permute.xlu0 4
  %481 = vperm.xlu0 %480, %v38
  %v482 = vpop.permute.xlu0 %481
  %484 = vset.pattern.permute.xlu0 4
  %485 = vperm.xlu0 %484, %v39
  %v486 = vpop.permute.xlu0 %485
  %488 = vset.pattern.permute.xlu0 4
  %489 = vperm.xlu0 %488, %v40
  %v490 = vpop.permute.xlu0 %489
  %492 = vset.pattern.permute.xlu0 4
  %493 = vperm.xlu0 %492, %v41
  %v494 = vpop.permute.xlu0 %493
  %496 = vset.pattern.permute.xlu0 4
  %497 = vperm.xlu0 %496, %v42
  %v498 = vpop.permute.xlu0 %497
  %500 = vset.pattern.permute.xlu0 4
  %501 = vperm.xlu0 %500, %v43
  %v502 = vpop.permute.xlu0 %501
  %v505 = vsel %vm286, %v52, 0
  %v508 = vsel %vm286, %v53, 0
  %v511 = vsel %vm286, %v54, 0
  %v514 = vsel %vm286, %v55, 0
  %v517 = vsel %vm286, %v56, 0
  %v520 = vsel %vm286, %v57, 0
  %v523 = vsel %vm286, %v58, 0
  %v526 = vsel %vm286, %v59, 0
  %528 = vmatprep.subr.mxu0 0.0
  %529 = vmatpush1.msra.mxu0 %v464
  %530 = vmatprep.subr.mxu0 0.0
  %531 = vmatpush1.msra.mxu0 %v465
  %532 = vmatprep.subr.mxu0 0.0
  %533 = vmatpush1.msra.mxu0 %v466
  %534 = vmatprep.subr.mxu0 0.0
  %535 = vmatpush1.msra.mxu0 %v467
  %536 = vmatprep.subr.mxu0 0.0
  %537 = vmatpush1.msra.mxu0 %v468
  %538 = vmatprep.subr.mxu0 0.0
  %539 = vmatpush1.msra.mxu0 %v469
  %540 = vmatprep.subr.mxu0 0.0
  %541 = vmatpush1.msra.mxu0 %v470
  %542 = vmatprep.subr.mxu0 0.0
  %543 = vmatpush1.msra.mxu0 %v471
  %544 = vmatprep.subr.mxu0 0.0
  %545 = vmatpush1.msra.mxu0 0.0
  %546 = vmatprep.subr.mxu0 0.0
  %547 = vmatpush1.msra.mxu0 0.0
  %548 = vmatprep.subr.mxu0 0.0
  %549 = vmatpush1.msra.mxu0 0.0
  %550 = vmatprep.subr.mxu0 0.0
  %551 = vmatpush1.msra.mxu0 0.0
  %552 = vmatprep.subr.mxu0 0.0
  %553 = vmatpush1.msra.mxu0 0.0
  %554 = vmatprep.subr.mxu0 0.0
  %555 = vmatpush1.msra.mxu0 0.0
  %556 = vmatprep.subr.mxu0 0.0
  %557 = vmatpush1.msra.mxu0 0.0
  %558 = vmatprep.subr.mxu0 0.0
  %559 = vmatpush1.msra.mxu0 0.0
  %560 = vmatprep.subr.mxu0 0.0
  %561 = vmatpush1.msra.mxu0 0.0
  %562 = vmatprep.subr.mxu0 0.0
  %563 = vmatpush1.msra.mxu0 0.0
  %564 = vmatprep.subr.mxu0 0.0
  %565 = vmatpush1.msra.mxu0 0.0
  %566 = vmatprep.subr.mxu0 0.0
  %567 = vmatpush1.msra.mxu0 0.0
  %568 = vmatprep.subr.mxu0 0.0
  %569 = vmatpush1.msra.mxu0 0.0
  %570 = vmatprep.subr.mxu0 0.0
  %571 = vmatpush1.msra.mxu0 0.0
  %572 = vmatprep.subr.mxu0 0.0
  %573 = vmatpush1.msra.mxu0 0.0
  %574 = vmatprep.subr.mxu0 0.0
  %575 = vmatpush1.msra.mxu0 0.0
  %576 = vmatprep.subr.mxu0 0.0
  %577 = vmatpush1.msra.mxu0 0.0
  %578 = vmatprep.subr.mxu0 0.0
  %579 = vmatpush1.msra.mxu0 0.0
  %580 = vmatprep.subr.mxu0 0.0
  %581 = vmatpush1.msra.mxu0 0.0
  %582 = vmatprep.subr.mxu0 0.0
  %583 = vmatpush1.msra.mxu0 0.0
  %584 = vmatprep.subr.mxu0 0.0
  %585 = vmatpush1.msra.mxu0 0.0
  %586 = vmatprep.subr.mxu0 0.0
  %587 = vmatpush1.msra.mxu0 0.0
  %588 = vmatprep.subr.mxu0 0.0
  %589 = vmatpush1.msra.mxu0 0.0
  %590 = vmatprep.subr.mxu0 0.0
  %591 = vmatpush1.msra.mxu0 0.0
  %592 = vmatprep.mubr.f32.mxu0 0.0
  %593 = vmatmul.mubr.f32.gmra.mrb[0].mxu0 %v505
  %v594 = vpop.f32.mrb[0].mxu0
  %v595 = vadd.f32 %v474, %v594
  %v596 = vpop.f32.mrb[0].mxu0
  %597 = vmatprep.mubr.f32.mxu0 0.0
  %598 = vmatmul.mubr.f32.gmra.mrb[0].mxu0 %v508
  %v599 = vpop.f32.mrb[0].mxu0
  %v600 = vadd.f32 %v478, %v599
  %v601 = vpop.f32.mrb[0].mxu0
  %602 = vmatprep.mubr.f32.mxu0 0.0
  %603 = vmatmul.mubr.f32.gmra.mrb[0].mxu0 %v511
  %v604 = vpop.f32.mrb[0].mxu0
  %v605 = vadd.f32 %v482, %v604
  %v606 = vpop.f32.mrb[0].mxu0
  %607 = vmatprep.mubr.f32.mxu0 0.0
  %608 = vmatmul.mubr.f32.gmra.mrb[0].mxu0 %v514
  %v609 = vpop.f32.mrb[0].mxu0
  %v610 = vadd.f32 %v486, %v609
  %v611 = vpop.f32.mrb[0].mxu0
  %612 = vmatprep.mubr.f32.mxu0 0.0
  %613 = vmatmul.mubr.f32.gmra.mrb[0].mxu0 %v517
  %v614 = vpop.f32.mrb[0].mxu0
  %v615 = vadd.f32 %v490, %v614
  %v616 = vpop.f32.mrb[0].mxu0
  %617 = vmatprep.mubr.f32.mxu0 0.0
  %618 = vmatmul.mubr.f32.gmra.mrb[0].mxu0 %v520
  %v619 = vpop.f32.mrb[0].mxu0
  %v620 = vadd.f32 %v494, %v619
  %v621 = vpop.f32.mrb[0].mxu0
  %622 = vmatprep.mubr.f32.mxu0 0.0
  %623 = vmatmul.mubr.f32.gmra.mrb[0].mxu0 %v523
  %v624 = vpop.f32.mrb[0].mxu0
  %v625 = vadd.f32 %v498, %v624
  %v626 = vpop.f32.mrb[0].mxu0
  %627 = vmatprep.mubr.f32.mxu0 0.0
  %628 = vmatmul.mubr.f32.gmra.mrb[0].mxu0 %v526
  %v629 = vpop.f32.mrb[0].mxu0
  %v630 = vadd.f32 %v502, %v629
  %v631 = vpop.f32.mrb[0].mxu0
  %632 = vdwg.mxu0
  %v633 = vxor.u32 %v595, 2147483648
  %v634 = vxor.u32 %v600, 2147483648
  %v635 = vxor.u32 %v605, 2147483648
  %v636 = vxor.u32 %v610, 2147483648
  %v637 = vxor.u32 %v615, 2147483648
  %v638 = vxor.u32 %v620, 2147483648
  %v639 = vxor.u32 %v625, 2147483648
  %v640 = vxor.u32 %v630, 2147483648
  %v641 = vmul.f32 %v633, 1.442695
  %v642 = vpow.pop %v641
  %v643 = vmul.f32 %v634, 1.442695
  %v644 = vpow.pop %v643
  %v645 = vmul.f32 %v635, 1.442695
  %v646 = vpow.pop %v645
  %v647 = vmul.f32 %v636, 1.442695
  %v648 = vpow.pop %v647
  %v649 = vmul.f32 %v637, 1.442695
  %v650 = vpow.pop %v649
  %v651 = vmul.f32 %v638, 1.442695
  %v652 = vpow.pop %v651
  %v653 = vmul.f32 %v639, 1.442695
  %v654 = vpow.pop %v653
  %v655 = vmul.f32 %v640, 1.442695
  %v656 = vpow.pop %v655
  %v657 = vadd.f32 %v642, 1.0
  %v658 = vadd.f32 %v644, 1.0
  %v659 = vadd.f32 %v646, 1.0
  %v660 = vadd.f32 %v648, 1.0
  %v661 = vadd.f32 %v650, 1.0
  %v662 = vadd.f32 %v652, 1.0
  %v663 = vadd.f32 %v654, 1.0
  %v664 = vadd.f32 %v656, 1.0
  %v665 = vrcp.pop %v657
  %v666 = vmul.f32 1.0, %v665
  %v667 = vrcp.pop %v658
  %v668 = vmul.f32 1.0, %v667
  %v669 = vrcp.pop %v659
  %v670 = vmul.f32 1.0, %v669
  %v671 = vrcp.pop %v660
  %v672 = vmul.f32 1.0, %v671
  %v673 = vrcp.pop %v661
  %v674 = vmul.f32 1.0, %v673
  %v675 = vrcp.pop %v662
  %v676 = vmul.f32 1.0, %v675
  %v677 = vrcp.pop %v663
  %v678 = vmul.f32 1.0, %v677
  %v679 = vrcp.pop %v664
  %v680 = vmul.f32 1.0, %v679
  %v681 = vmul.f32 %v595, %v666
  %v682 = vmul.f32 %v600, %v668
  %v683 = vmul.f32 %v605, %v670
  %v684 = vmul.f32 %v610, %v672
  %v685 = vmul.f32 %v615, %v674
  %v686 = vmul.f32 %v620, %v676
  %v687 = vmul.f32 %v625, %v678
  %v688 = vmul.f32 %v630, %v680
  %v689 = vadd.f32 %v14, %v681
  %v690 = vadd.f32 %v15, %v682
  %v691 = vadd.f32 %v16, %v683
  %v692 = vadd.f32 %v17, %v684
  %v693 = vadd.f32 %v18, %v685
  %v694 = vadd.f32 %v19, %v686
  %v695 = vadd.f32 %v20, %v687
  %v696 = vadd.f32 %v21, %v688
  %697 = vst [vmem:[%s3] sm:$0xff] %v689
  %698 = vst [vmem:[%s3 + $0x8] sm:$0xff] %v690
  %699 = vst [vmem:[%s3 + $0x10] sm:$0xff] %v691
  %700 = vst [vmem:[%s3 + $0x18] sm:$0xff] %v692
  %701 = vst [vmem:[%s3 + $0x20] sm:$0xff] %v693
  %702 = vst [vmem:[%s3 + $0x28] sm:$0xff] %v694
  %703 = vst [vmem:[%s3 + $0x30] sm:$0xff] %v695
  %704 = vst [vmem:[%s3 + $0x38] sm:$0xff] %v696
  // Predicated region
  $region14: #{preconv_block.1} parent=0 // pred_check
    _
  $region15: #{preconv_block.1} parent=0 // pred_check_branch
    %706 = sbr.rel (0) target = $region17
  $region16: #{preconv_block.1} parent=0 // pred_region
    _
  $region17: #{preconv_block.1} parent=0 // pred_fallthru
    _
  // Predicated region
  $region18: #{preconv_block.1} parent=0 // pred_check
    _
  $region19: #{preconv_block.1} parent=0 // pred_check_branch
    %708 = sbr.rel (0) target = $region21
  $region20: #{preconv_block.1} parent=0 // pred_region
    _
  $region21: #{preconv_block.1} parent=0 // pred_fallthru
    _

</llo_original>
